<compile_context>
chip_gen: v7x
topology: tpu7x:2x2x1
jax: 0.10.0
libtpu: 0.0.40
codegen_flags: <defaults>
</compile_context>

<pallas_src>
import functools

import jax
import jax.numpy as jnp
from jax.experimental import pallas as pl
from jax.experimental.pallas import tpu as pltpu


def _residual_linear_kernel(x_ref, w_ref, b_ref, o_ref):
    # x_ref: (TM, Dp)   w_ref: (Dp, Dp)   b_ref: (1, Dp)   o_ref: (TM, Dp)
    x = x_ref[...]
    acc = jnp.dot(x, w_ref[...], preferred_element_type=jnp.float32)
    acc = acc + b_ref[...]                        # broadcast bias over rows
    if x.dtype == jnp.float32:
        acc = acc + x                             # no redundant cast for f32
    else:
        acc = acc + x.astype(jnp.float32)         # f32 residual add (v5e-safe)
    o_ref[...] = acc.astype(o_ref.dtype)


def _round_up(v, m):
    return ((v + m - 1) // m) * m


def _choose_tm(rows, d_padded, dtype_bytes=4, vmem_budget_bytes=24 * 1024 * 1024):
    """Pick a row-tile size that is a multiple of 8 and fits a conservative
    VMEM budget (double-buffered x + out tiles, resident W and b)."""
    tm = 512
    def footprint(t):
        tiles = 2 * 2 * t * d_padded * dtype_bytes          # x + out, 2 buffers each
        resident = 2 * (d_padded * d_padded + d_padded) * dtype_bytes  # W + b (dbl-buf)
        return tiles + resident
    while tm > 8 and footprint(tm) > vmem_budget_bytes:
        tm //= 2
    tm = min(tm, max(8, _round_up(rows, 8)))                 # don't exceed row count
    return max(8, (tm // 8) * 8)


@functools.partial(jax.jit, static_argnames=())
def residual_linear(x, w, b):
    """Residual(Linear)(x) = x @ w + b + x, fused in a Pallas kernel.

    x: (B, T, D)   w: (D, D)   b: (D,)
    """
    B, T, D = x.shape
    R = B * T

    # Lane-dense padding of the feature dim (multiple of 128).
    Dp = _round_up(D, 128)
    # Row-tile size + pad rows to a whole number of tiles.
    TM = _choose_tm(R, Dp)
    Rp = _round_up(R, TM)

    x2d = x.reshape(R, D)
    x_p = jnp.pad(x2d, ((0, Rp - R), (0, Dp - D)))
    w_p = jnp.pad(w, ((0, Dp - D), (0, Dp - D)))
    b_p = jnp.pad(b, (0, Dp - D)).reshape(1, Dp)

    n_tiles = Rp // TM

    cost = pl.CostEstimate(
        flops=2 * R * D * D,
        transcendentals=0,
        bytes_accessed=(2 * R * D + D * D + D) * x.dtype.itemsize,
    )

    out_p = pl.pallas_call(
        _residual_linear_kernel,
        out_shape=jax.ShapeDtypeStruct((Rp, Dp), x.dtype),
        grid_spec=pltpu.PrefetchScalarGridSpec(
            num_scalar_prefetch=0,
            grid=(n_tiles,),
            in_specs=[
                pl.BlockSpec((TM, Dp), lambda i: (i, 0)),   # x   : row-tiled
                pl.BlockSpec((Dp, Dp), lambda i: (0, 0)),   # W   : resident
                pl.BlockSpec((1, Dp), lambda i: (0, 0)),    # b   : resident
            ],
            out_specs=pl.BlockSpec((TM, Dp), lambda i: (i, 0)),
        ),
        compiler_params=pltpu.CompilerParams(
            dimension_semantics=("parallel",),              # megacore on v7x
        ),
        cost_estimate=cost,
    )(x_p, w_p, b_p)

    return out_p[:R, :D].reshape(B, T, D)


if __name__ == "__main__":
    key = jax.random.PRNGKey(0)
    kx, kw, kb = jax.random.split(key, 3)

    B, T, D = 2, 8, 32                       # small shapes implied by the module's use
    x = jax.random.normal(kx, (B, T, D), dtype=jnp.float32)
    # Deterministic synthetic parameters for the wrapped fn (Linear(D, D)).
    w = jax.random.normal(kw, (D, D), dtype=jnp.float32) * 0.05
    b = jax.random.normal(kb, (D,), dtype=jnp.float32) * 0.01

    out = residual_linear(x, w, b)
    out = jax.block_until_ready(out)

    # Reference check (plain JAX): fn(x) + x
    ref = jnp.einsum("btd,de->bte", x, w) + b + x
    assert out.shape == (B, T, D)
    assert jnp.allclose(out, ref, atol=1e-5, rtol=1e-5)

    print("KERNEL_OK")
</pallas_src>

<mosaic_0001>
module attributes {stable_mosaic.version = 11 : i64} {
  func.func @_residual_linear_kernel(%arg0: i32, %arg1: memref<16x128xf32, #tpu.memory_space<vmem>>, %arg2: memref<128x128xf32, #tpu.memory_space<vmem>>, %arg3: memref<1x128xf32, #tpu.memory_space<vmem>>, %arg4: memref<16x128xf32, #tpu.memory_space<vmem>>) attributes {dimension_semantics = [#tpu.dimension_semantics<parallel>], iteration_bounds = array<i64: 1>, scalar_prefetch = 0 : i64, scratch_operands = 0 : i64, tpu.core_type = #tpu.core_type<tc>, window_params = [{transform_indices = @transform_0, window_bounds = array<i64: 16, 128>}, {pipeline_mode = #tpu.pipeline_mode<synchronous>, transform_indices = @transform_1, window_bounds = array<i64: 128, 128>}, {pipeline_mode = #tpu.pipeline_mode<synchronous>, transform_indices = @transform_2, window_bounds = array<i64: 1, 128>}, {transform_indices = @transform_3, window_bounds = array<i64: 16, 128>}]} {
    %c0 = arith.constant 0 : index
    %c0_0 = arith.constant 0 : index
    %0 = vector.load %arg1[%c0, %c0_0] : memref<16x128xf32, #tpu.memory_space<vmem>>, vector<16x128xf32>
    %c0_1 = arith.constant 0 : index
    %c0_2 = arith.constant 0 : index
    %1 = vector.load %arg2[%c0_1, %c0_2] : memref<128x128xf32, #tpu.memory_space<vmem>>, vector<128x128xf32>
    %cst = arith.constant dense<0.000000e+00> : vector<16x128xf32>
    %2 = tpu.matmul %0, %1, %cst {dimension_numbers = #tpu.dot_dimension_numbers<[1], [0], [0], [1], [0, 0, 1, 1], [], []>} : vector<16x128xf32>, vector<128x128xf32>, vector<16x128xf32> -> vector<16x128xf32>
    %c0_3 = arith.constant 0 : index
    %c0_4 = arith.constant 0 : index
    %3 = vector.load %arg3[%c0_3, %c0_4] : memref<1x128xf32, #tpu.memory_space<vmem>>, vector<1x128xf32>
    %4 = vector.broadcast %3 : vector<1x128xf32> to vector<16x128xf32>
    %5 = arith.addf %2, %4 : vector<16x128xf32>
    %6 = arith.addf %5, %0 : vector<16x128xf32>
    %c0_5 = arith.constant 0 : index
    %c0_6 = arith.constant 0 : index
    %7 = vector.load %arg4[%c0_5, %c0_6] : memref<16x128xf32, #tpu.memory_space<vmem>>, vector<16x128xf32>
    tpu.vector_store %arg4[%c0_5, %c0_6], %6 {strides = array<i32>} : memref<16x128xf32, #tpu.memory_space<vmem>>, vector<16x128xf32>,
    return
  }
  func.func @transform_0(%arg0: i32) -> (i32, i32) {
    %c0_i32 = arith.constant 0 : i32
    %c0_i32_0 = arith.constant 0 : i32
    return %arg0, %c0_i32 : i32, i32
  }
  func.func @transform_1(%arg0: i32) -> (i32, i32) {
    %c0_i32 = arith.constant 0 : i32
    %c0_i32_0 = arith.constant 0 : i32
    %c0_i32_1 = arith.constant 0 : i32
    return %c0_i32, %c0_i32_0 : i32, i32
  }
  func.func @transform_2(%arg0: i32) -> (i32, i32) {
    %c0_i32 = arith.constant 0 : i32
    %c0_i32_0 = arith.constant 0 : i32
    %c0_i32_1 = arith.constant 0 : i32
    return %c0_i32, %c0_i32_0 : i32, i32
  }
  func.func @transform_3(%arg0: i32) -> (i32, i32) {
    %c0_i32 = arith.constant 0 : i32
    %c0_i32_0 = arith.constant 0 : i32
    return %arg0, %c0_i32 : i32, i32
  }
}

</mosaic_0001>

<llo_original>
// kernel: residual_linear.1
$region0: #{residual_linear.1}
  #allocation0 [shape = 'u32[]', space=smem, size = 0x4, offset = 0x4, fixed_abs, tag = 'smem constant byte address 0x4 - core index']
  #allocation1 [shape = 'u32[144,128]{1,0:T(1,128)}', space=vmem, size = 0x12000, scoped, tag = 'internal scratch']
  %s0 = inlined_call_operand.vmem [shape: f32[16,128], index: 0, kind: input, shape index: {}]
  %s1 = inlined_call_operand.vmem [shape: f32[128,128], index: 1, kind: input, shape index: {}]
  %s2 = inlined_call_operand.vmem [shape: f32[1,128], index: 2, kind: input, shape index: {}]
  %s3 = inlined_call_operand.vmem [shape: f32[16,128], index: 3, kind: output, shape index: {}]
  %s4 = sld [smem:[#allocation0]]
  $region22: #{residual_linear.1} parent=0
    _
  %s6 = ssub.s32 1, %s4
  %s7 = scalar_select 0, %s6, %s4
  // Predicated region
  $region2: #{residual_linear.1} parent=0 // pred_check
    _
  $region3: #{residual_linear.1} parent=0 // pred_check_branch
    %9 = sbr.rel (0) target = $region5
  $region4: #{residual_linear.1} parent=0 // pred_region
    _
  $region5: #{residual_linear.1} parent=0 // pred_fallthru
    _
  // Predicated region
  $region6: #{residual_linear.1} parent=0 // pred_check
    _
  $region7: #{residual_linear.1} parent=0 // pred_check_branch
    %11 = sbr.rel (0) target = $region9
  $region8: #{residual_linear.1} parent=0 // pred_region
    _
  $region9: #{residual_linear.1} parent=0 // pred_fallthru
    _
  // Predicated region
  $region10: #{residual_linear.1} parent=0 // pred_check
    _
  $region11: #{residual_linear.1} parent=0 // pred_check_branch
    %13 = sbr.rel (0) target = $region13
  $region12: #{residual_linear.1} parent=0 // pred_region
    _
  $region13: #{residual_linear.1} parent=0 // pred_fallthru
    _
  %v14 = vld [vmem:[%s0] sm:$0xff]
  %v15 = vld [vmem:[%s0 + $0x8] sm:$0xff]
  %v16 = vld [vmem:[%s1] sm:$0xff]
  %v17 = vld [vmem:[%s1 + $0x8] sm:$0xff]
  %v18 = vld [vmem:[%s1 + $0x10] sm:$0xff]
  %v19 = vld [vmem:[%s1 + $0x18] sm:$0xff]
  %v20 = vld [vmem:[%s1 + $0x20] sm:$0xff]
  %v21 = vld [vmem:[%s1 + $0x28] sm:$0xff]
  %v22 = vld [vmem:[%s1 + $0x30] sm:$0xff]
  %v23 = vld [vmem:[%s1 + $0x38] sm:$0xff]
  %v24 = vld [vmem:[%s1 + $0x40] sm:$0xff]
  %v25 = vld [vmem:[%s1 + $0x48] sm:$0xff]
  %v26 = vld [vmem:[%s1 + $0x50] sm:$0xff]
  %v27 = vld [vmem:[%s1 + $0x58] sm:$0xff]
  %v28 = vld [vmem:[%s1 + $0x60] sm:$0xff]
  %v29 = vld [vmem:[%s1 + $0x68] sm:$0xff]
  %v30 = vld [vmem:[%s1 + $0x70] sm:$0xff]
  %v31 = vld [vmem:[%s1 + $0x78] sm:$0xff]
  %v32 = vld [vmem:[%s2] sm:$0x1]
  %v34 = vlaneseq
  %v35 = vshrl.u32 %v34, 7
  %v36 = vsub.s32 0, %v35
  %v37 = vrot.slane %v32, %v36
  %39 = vmatprep.subr.mxu0 0.0
  %40 = vmatpush1.msra.mxu0 %v16
  %41 = vmatprep.subr.mxu0 0.0
  %42 = vmatpush1.msra.mxu0 %v17
  %43 = vmatprep.subr.mxu0 0.0
  %44 = vmatpush1.msra.mxu0 %v18
  %45 = vmatprep.subr.mxu0 0.0
  %46 = vmatpush1.msra.mxu0 %v19
  %47 = vmatprep.subr.mxu0 0.0
  %48 = vmatpush1.msra.mxu0 %v20
  %49 = vmatprep.subr.mxu0 0.0
  %50 = vmatpush1.msra.mxu0 %v21
  %51 = vmatprep.subr.mxu0 0.0
  %52 = vmatpush1.msra.mxu0 %v22
  %53 = vmatprep.subr.mxu0 0.0
  %54 = vmatpush1.msra.mxu0 %v23
  %55 = vmatprep.subr.mxu0 0.0
  %56 = vmatpush1.msra.mxu0 %v24
  %57 = vmatprep.subr.mxu0 0.0
  %58 = vmatpush1.msra.mxu0 %v25
  %59 = vmatprep.subr.mxu0 0.0
  %60 = vmatpush1.msra.mxu0 %v26
  %61 = vmatprep.subr.mxu0 0.0
  %62 = vmatpush1.msra.mxu0 %v27
  %63 = vmatprep.subr.mxu0 0.0
  %64 = vmatpush1.msra.mxu0 %v28
  %65 = vmatprep.subr.mxu0 0.0
  %66 = vmatpush1.msra.mxu0 %v29
  %67 = vmatprep.subr.mxu0 0.0
  %68 = vmatpush1.msra.mxu0 %v30
  %69 = vmatprep.subr.mxu0 0.0
  %70 = vmatpush1.msra.mxu0 %v31
  %71 = vmatprep.subr.mxu0 0.0
  %72 = vmatpush1.msra.mxu0 0.0
  %73 = vmatprep.subr.mxu0 0.0
  %74 = vmatpush1.msra.mxu0 0.0
  %75 = vmatprep.subr.mxu0 0.0
  %76 = vmatpush1.msra.mxu0 0.0
  %77 = vmatprep.subr.mxu0 0.0
  %78 = vmatpush1.msra.mxu0 0.0
  %79 = vmatprep.subr.mxu0 0.0
  %80 = vmatpush1.msra.mxu0 0.0
  %81 = vmatprep.subr.mxu0 0.0
  %82 = vmatpush1.msra.mxu0 0.0
  %83 = vmatprep.subr.mxu0 0.0
  %84 = vmatpush1.msra.mxu0 0.0
  %85 = vmatprep.subr.mxu0 0.0
  %86 = vmatpush1.msra.mxu0 0.0
  %87 = vmatprep.subr.mxu0 0.0
  %88 = vmatpush1.msra.mxu0 0.0
  %89 = vmatprep.subr.mxu0 0.0
  %90 = vmatpush1.msra.mxu0 0.0
  %91 = vmatprep.subr.mxu0 0.0
  %92 = vmatpush1.msra.mxu0 0.0
  %93 = vmatprep.subr.mxu0 0.0
  %94 = vmatpush1.msra.mxu0 0.0
  %95 = vmatprep.subr.mxu0 0.0
  %96 = vmatpush1.msra.mxu0 0.0
  %97 = vmatprep.subr.mxu0 0.0
  %98 = vmatpush1.msra.mxu0 0.0
  %99 = vmatprep.subr.mxu0 0.0
  %100 = vmatpush1.msra.mxu0 0.0
  %101 = vmatprep.subr.mxu0 0.0
  %102 = vmatpush1.msra.mxu0 0.0
  %103 = vmatprep.mubr.f32.mxu0 0.0
  %104 = vmatmul.mubr.f32.gmra.mrb[0].mxu0 %v14
  %v105 = vpop.f32.mrb[0].mxu0
  %v106 = vadd.f32 %v37, %v105
  %v107 = vpop.f32.mrb[0].mxu0
  %108 = vmatprep.mubr.f32.mxu0 0.0
  %109 = vmatmul.mubr.f32.gmra.mrb[0].mxu0 %v15
  %v110 = vpop.f32.mrb[0].mxu0
  %v111 = vadd.f32 %v37, %v110
  %v112 = vpop.f32.mrb[0].mxu0
  %113 = vdwg.mxu0
  %v114 = vadd.f32 %v106, %v14
  %v115 = vadd.f32 %v111, %v15
  %116 = vst [vmem:[%s3] sm:$0xff] %v114
  %117 = vst [vmem:[%s3 + $0x8] sm:$0xff] %v115
  // Predicated region
  $region14: #{residual_linear.1} parent=0 // pred_check
    _
  $region15: #{residual_linear.1} parent=0 // pred_check_branch
    %119 = sbr.rel (0) target = $region17
  $region16: #{residual_linear.1} parent=0 // pred_region
    _
  $region17: #{residual_linear.1} parent=0 // pred_fallthru
    _
  // Predicated region
  $region18: #{residual_linear.1} parent=0 // pred_check
    _
  $region19: #{residual_linear.1} parent=0 // pred_check_branch
    %121 = sbr.rel (0) target = $region21
  $region20: #{residual_linear.1} parent=0 // pred_region
    _
  $region21: #{residual_linear.1} parent=0 // pred_fallthru
    _

</llo_original>
